<compile_context>
chip_gen: v7x
topology: tpu7x:2x2x1
jax: 0.10.0
libtpu: 0.0.40
codegen_flags: <defaults>
</compile_context>

<pallas_src>
from functools import partial

import jax
import jax.numpy as jnp
from jax.experimental import pallas as pl
from jax.experimental.pallas import tpu as pltpu

# Layer dims of the PyTorch model: 8 -> 6 -> 4 -> 2 -> 1.
_DIMS = ((8, 6), (6, 4), (4, 2), (2, 1))

# Flat offsets of each layer's weights / biases inside the packed SMEM slabs.
_W_OFF, _B_OFF = [], []
_wo = _bo = 0
for _fin, _fout in _DIMS:
    _W_OFF.append(_wo)
    _B_OFF.append(_bo)
    _wo += _fin * _fout
    _bo += _fout
_W_SIZE, _B_SIZE = _wo, _bo            # 82 weights, 13 biases

_CHUNK_ROWS = 8                        # 8 sublanes x 128 lanes = 1024 elems = 1 vreg/feature


def _round_up(n, m):
    return ((n + m - 1) // m) * m


def mlp_kernel(x_ref, w_ref, b_ref, o_ref):
    """Fused MLP on a dense, batch-on-(sublanes+lanes) tile.

    x_ref : (8, TR, 128) f32 VMEM   -- feature-major, batch packed into (TR, 128)
    w_ref : (82,)        f32 SMEM   -- all layer weights, resident across grid steps
    b_ref : (13,)        f32 SMEM   -- all layer biases
    o_ref : (TR, 128)    f32 VMEM   -- lane-dense output tile
    """
    tr = o_ref.shape[0]

    # Hoist the ~95 loop-invariant scalar weight/bias reads out of the chunk loop.
    w = [[[w_ref[_W_OFF[idx] + k * fout + j] for j in range(fout)]
          for k in range(fin)]
         for idx, (fin, fout) in enumerate(_DIMS)]
    b = [[b_ref[_B_OFF[idx] + j] for j in range(fout)]
         for idx, (_fin, fout) in enumerate(_DIMS)]

    # Chunked pass over the tile: all 4 layers per 1024-element chunk keeps the
    # live set (~8 input + <=6 intermediate vregs) far under the 64-vreg file.
    @pl.loop(0, tr // _CHUNK_ROWS)
    def _(c):
        r0 = pl.multiple_of(c * _CHUNK_ROWS, _CHUNK_ROWS)
        # Dense (CHUNK_ROWS, 128) slab per input feature.
        h = [x_ref[k, pl.ds(r0, _CHUNK_ROWS), :] for k in range(8)]
        for idx, (fin, fout) in enumerate(_DIMS):
            nxt = []
            for j in range(fout):
                acc = h[0] * w[idx][0][j] + b[idx][j]       # bias folded into 1st FMA
                for k in range(1, fin):
                    acc = acc + h[k] * w[idx][k][j]         # VPU scalar-broadcast FMAs
                # sigmoid(x) == 0.5*(1 + tanh(0.5*x)) -> a single EUP push / element.
                nxt.append(0.5 * jnp.tanh(0.5 * acc) + 0.5)
            h = nxt
        o_ref[pl.ds(r0, _CHUNK_ROWS), :] = h[0].astype(o_ref.dtype)


def pack_params(params):
    """Flatten the 8 weight/bias operands into two tiny 1D SMEM slabs."""
    w_flat = jnp.concatenate([params[f"w{i}"].reshape(-1).astype(jnp.float32)
                              for i in range(1, 5)])
    b_flat = jnp.concatenate([params[f"b{i}"].reshape(-1).astype(jnp.float32)
                              for i in range(1, 5)])
    return w_flat, b_flat


@partial(jax.jit, static_argnames=("tb",))
def mlp_forward(x, params, tb=32768):
    """x: (B, 8) float32. Returns (B, 1), matching the torch module's forward."""
    B, F = x.shape
    assert F == 8, F

    tb = max(1024, (int(tb) // 1024) * 1024)     # tile must be a multiple of 8*128
    B_pad = _round_up(B, 1024)
    TB = min(tb, B_pad)
    # v7x has 2 TensorCores: keep >= 2 grid steps on the "parallel" batch axis
    # when the batch is large enough to split (v5e/v6e: 1 TC, 1 step is fine).
    if B_pad == TB and TB >= 2048:
        TB = _round_up(TB // 2, 1024)
    B_pad = _round_up(B, TB)
    R, TR = B_pad // 128, TB // 128

    # Batch on sublanes+lanes: (8, B_pad) then a free, contiguous reshape to
    # (8, R, 128).  Under jit the pad+transpose fuse into a single HBM pass.
    xp = jnp.pad(x.astype(jnp.float32).T, ((0, 0), (0, B_pad - B))).reshape(F, R, 128)

    w_flat, b_flat = pack_params(params)

    smem = pl.BlockSpec(memory_space=pltpu.MemorySpace.SMEM)
    out = pl.pallas_call(
        mlp_kernel,
        out_shape=jax.ShapeDtypeStruct((R, 128), jnp.float32),
        grid=(B_pad // TB,),
        in_specs=[pl.BlockSpec((F, TR, 128), lambda i: (0, i, 0)),
                  smem, smem],
        out_specs=pl.BlockSpec((TR, 128), lambda i: (i, 0)),
        compiler_params=pltpu.CompilerParams(
            dimension_semantics=("parallel",)),      # shard batch over TCs on v7x
    )(xp, w_flat, b_flat)

    # Restore the torch (B, 1) output layout (free reshape + cheap slice).
    return out.reshape(B_pad)[:B].reshape(B, 1)


def init_params(key):
    """Mirror torch.nn.Linear default init U(-1/sqrt(fan_in), +1/sqrt(fan_in)).

    Weights stored transposed as (in_features, out_features); biases as (1, out)."""
    params = {}
    for i, (fin, fout) in enumerate(_DIMS, start=1):
        key, kw, kb = jax.random.split(key, 3)
        bound = 1.0 / jnp.sqrt(fin)
        params[f"w{i}"] = jax.random.uniform(
            kw, (fin, fout), jnp.float32, minval=-bound, maxval=bound)
        params[f"b{i}"] = jax.random.uniform(
            kb, (1, fout), jnp.float32, minval=-bound, maxval=bound)
    return params


def reference_forward(x, params):
    h = x
    for i in range(1, 5):
        h = jax.nn.sigmoid(h @ params[f"w{i}"] + params[f"b{i}"])
    return h


if __name__ == "__main__":
    key = jax.random.PRNGKey(0)
    key, kx = jax.random.split(key)
    params = init_params(key)

    # Small deterministic test (single grid step, single chunk iteration).
    B = 8
    x = jax.random.normal(kx, (B, 8), jnp.float32)
    out = jax.block_until_ready(mlp_forward(x, params))
    ref = reference_forward(x, params)
    assert out.shape == (B, 1), out.shape
    assert jnp.allclose(out, ref, atol=1e-5, rtol=1e-5), (
        f"max err {jnp.max(jnp.abs(out - ref))}")

    # Ragged batch + multi-step grid (exercises tiling / padding path).
    key, kx2 = jax.random.split(key)
    B2 = 2500
    x2 = jax.random.normal(kx2, (B2, 8), jnp.float32)
    out2 = jax.block_until_ready(mlp_forward(x2, params, tb=1024))
    ref2 = reference_forward(x2, params)
    assert out2.shape == (B2, 1), out2.shape
    assert jnp.allclose(out2, ref2, atol=1e-5, rtol=1e-5), (
        f"max err {jnp.max(jnp.abs(out2 - ref2))}")

    # Default big-tile path (exercises the >=2-grid-step cap + multi-chunk loop).
    key, kx3 = jax.random.split(key)
    B3 = 4500
    x3 = jax.random.normal(kx3, (B3, 8), jnp.float32)
    out3 = jax.block_until_ready(mlp_forward(x3, params))
    ref3 = reference_forward(x3, params)
    assert out3.shape == (B3, 1), out3.shape
    assert jnp.allclose(out3, ref3, atol=1e-5, rtol=1e-5), (
        f"max err {jnp.max(jnp.abs(out3 - ref3))}")

    print("KERNEL_OK")
</pallas_src>

<mosaic_0001>
module attributes {stable_mosaic.version = 11 : i64} {
  func.func @mlp_kernel(%arg0: i32, %arg1: memref<8x8x128xf32, #tpu.memory_space<vmem>>, %arg2: memref<82xf32, #tpu.memory_space<smem>>, %arg3: memref<13xf32, #tpu.memory_space<smem>>, %arg4: memref<8x128xf32, #tpu.memory_space<vmem>>) attributes {dimension_semantics = [#tpu.dimension_semantics<parallel>], iteration_bounds = array<i64: 1>, scalar_prefetch = 0 : i64, scratch_operands = 0 : i64, tpu.core_type = #tpu.core_type<tc>, window_params = [{transform_indices = @transform_0, window_bounds = array<i64: 8, 8, 128>}, {transform_indices = @transform_1, window_bounds = array<i64: 82>}, {transform_indices = @transform_2, window_bounds = array<i64: 13>}, {transform_indices = @transform_3, window_bounds = array<i64: 8, 128>}]} {
    %c0 = arith.constant 0 : index
    %0 = memref.load %arg2[%c0] : memref<82xf32, #tpu.memory_space<smem>>
    %c1 = arith.constant 1 : index
    %1 = memref.load %arg2[%c1] : memref<82xf32, #tpu.memory_space<smem>>
    %c2 = arith.constant 2 : index
    %2 = memref.load %arg2[%c2] : memref<82xf32, #tpu.memory_space<smem>>
    %c3 = arith.constant 3 : index
    %3 = memref.load %arg2[%c3] : memref<82xf32, #tpu.memory_space<smem>>
    %c4 = arith.constant 4 : index
    %4 = memref.load %arg2[%c4] : memref<82xf32, #tpu.memory_space<smem>>
    %c5 = arith.constant 5 : index
    %5 = memref.load %arg2[%c5] : memref<82xf32, #tpu.memory_space<smem>>
    %c6 = arith.constant 6 : index
    %6 = memref.load %arg2[%c6] : memref<82xf32, #tpu.memory_space<smem>>
    %c7 = arith.constant 7 : index
    %7 = memref.load %arg2[%c7] : memref<82xf32, #tpu.memory_space<smem>>
    %c8 = arith.constant 8 : index
    %8 = memref.load %arg2[%c8] : memref<82xf32, #tpu.memory_space<smem>>
    %c9 = arith.constant 9 : index
    %9 = memref.load %arg2[%c9] : memref<82xf32, #tpu.memory_space<smem>>
    %c10 = arith.constant 10 : index
    %10 = memref.load %arg2[%c10] : memref<82xf32, #tpu.memory_space<smem>>
    %c11 = arith.constant 11 : index
    %11 = memref.load %arg2[%c11] : memref<82xf32, #tpu.memory_space<smem>>
    %c12 = arith.constant 12 : index
    %12 = memref.load %arg2[%c12] : memref<82xf32, #tpu.memory_space<smem>>
    %c13 = arith.constant 13 : index
    %13 = memref.load %arg2[%c13] : memref<82xf32, #tpu.memory_space<smem>>
    %c14 = arith.constant 14 : index
    %14 = memref.load %arg2[%c14] : memref<82xf32, #tpu.memory_space<smem>>
    %c15 = arith.constant 15 : index
    %15 = memref.load %arg2[%c15] : memref<82xf32, #tpu.memory_space<smem>>
    %c16 = arith.constant 16 : index
    %16 = memref.load %arg2[%c16] : memref<82xf32, #tpu.memory_space<smem>>
    %c17 = arith.constant 17 : index
    %17 = memref.load %arg2[%c17] : memref<82xf32, #tpu.memory_space<smem>>
    %c18 = arith.constant 18 : index
    %18 = memref.load %arg2[%c18] : memref<82xf32, #tpu.memory_space<smem>>
    %c19 = arith.constant 19 : index
    %19 = memref.load %arg2[%c19] : memref<82xf32, #tpu.memory_space<smem>>
    %c20 = arith.constant 20 : index
    %20 = memref.load %arg2[%c20] : memref<82xf32, #tpu.memory_space<smem>>
    %c21 = arith.constant 21 : index
    %21 = memref.load %arg2[%c21] : memref<82xf32, #tpu.memory_space<smem>>
    %c22 = arith.constant 22 : index
    %22 = memref.load %arg2[%c22] : memref<82xf32, #tpu.memory_space<smem>>
    %c23 = arith.constant 23 : index
    %23 = memref.load %arg2[%c23] : memref<82xf32, #tpu.memory_space<smem>>
    %c24 = arith.constant 24 : index
    %24 = memref.load %arg2[%c24] : memref<82xf32, #tpu.memory_space<smem>>
    %c25 = arith.constant 25 : index
    %25 = memref.load %arg2[%c25] : memref<82xf32, #tpu.memory_space<smem>>
    %c26 = arith.constant 26 : index
    %26 = memref.load %arg2[%c26] : memref<82xf32, #tpu.memory_space<smem>>
    %c27 = arith.constant 27 : index
    %27 = memref.load %arg2[%c27] : memref<82xf32, #tpu.memory_space<smem>>
    %c28 = arith.constant 28 : index
    %28 = memref.load %arg2[%c28] : memref<82xf32, #tpu.memory_space<smem>>
    %c29 = arith.constant 29 : index
    %29 = memref.load %arg2[%c29] : memref<82xf32, #tpu.memory_space<smem>>
    %c30 = arith.constant 30 : index
    %30 = memref.load %arg2[%c30] : memref<82xf32, #tpu.memory_space<smem>>
    %c31 = arith.constant 31 : index
    %31 = memref.load %arg2[%c31] : memref<82xf32, #tpu.memory_space<smem>>
    %c32 = arith.constant 32 : index
    %32 = memref.load %arg2[%c32] : memref<82xf32, #tpu.memory_space<smem>>
    %c33 = arith.constant 33 : index
    %33 = memref.load %arg2[%c33] : memref<82xf32, #tpu.memory_space<smem>>
    %c34 = arith.constant 34 : index
    %34 = memref.load %arg2[%c34] : memref<82xf32, #tpu.memory_space<smem>>
    %c35 = arith.constant 35 : index
    %35 = memref.load %arg2[%c35] : memref<82xf32, #tpu.memory_space<smem>>
    %c36 = arith.constant 36 : index
    %36 = memref.load %arg2[%c36] : memref<82xf32, #tpu.memory_space<smem>>
    %c37 = arith.constant 37 : index
    %37 = memref.load %arg2[%c37] : memref<82xf32, #tpu.memory_space<smem>>
    %c38 = arith.constant 38 : index
    %38 = memref.load %arg2[%c38] : memref<82xf32, #tpu.memory_space<smem>>
    %c39 = arith.constant 39 : index
    %39 = memref.load %arg2[%c39] : memref<82xf32, #tpu.memory_space<smem>>
    %c40 = arith.constant 40 : index
    %40 = memref.load %arg2[%c40] : memref<82xf32, #tpu.memory_space<smem>>
    %c41 = arith.constant 41 : index
    %41 = memref.load %arg2[%c41] : memref<82xf32, #tpu.memory_space<smem>>
    %c42 = arith.constant 42 : index
    %42 = memref.load %arg2[%c42] : memref<82xf32, #tpu.memory_space<smem>>
    %c43 = arith.constant 43 : index
    %43 = memref.load %arg2[%c43] : memref<82xf32, #tpu.memory_space<smem>>
    %c44 = arith.constant 44 : index
    %44 = memref.load %arg2[%c44] : memref<82xf32, #tpu.memory_space<smem>>
    %c45 = arith.constant 45 : index
    %45 = memref.load %arg2[%c45] : memref<82xf32, #tpu.memory_space<smem>>
    %c46 = arith.constant 46 : index
    %46 = memref.load %arg2[%c46] : memref<82xf32, #tpu.memory_space<smem>>
    %c47 = arith.constant 47 : index
    %47 = memref.load %arg2[%c47] : memref<82xf32, #tpu.memory_space<smem>>
    %c48 = arith.constant 48 : index
    %48 = memref.load %arg2[%c48] : memref<82xf32, #tpu.memory_space<smem>>
    %c49 = arith.constant 49 : index
    %49 = memref.load %arg2[%c49] : memref<82xf32, #tpu.memory_space<smem>>
    %c50 = arith.constant 50 : index
    %50 = memref.load %arg2[%c50] : memref<82xf32, #tpu.memory_space<smem>>
    %c51 = arith.constant 51 : index
    %51 = memref.load %arg2[%c51] : memref<82xf32, #tpu.memory_space<smem>>
    %c52 = arith.constant 52 : index
    %52 = memref.load %arg2[%c52] : memref<82xf32, #tpu.memory_space<smem>>
    %c53 = arith.constant 53 : index
    %53 = memref.load %arg2[%c53] : memref<82xf32, #tpu.memory_space<smem>>
    %c54 = arith.constant 54 : index
    %54 = memref.load %arg2[%c54] : memref<82xf32, #tpu.memory_space<smem>>
    %c55 = arith.constant 55 : index
    %55 = memref.load %arg2[%c55] : memref<82xf32, #tpu.memory_space<smem>>
    %c56 = arith.constant 56 : index
    %56 = memref.load %arg2[%c56] : memref<82xf32, #tpu.memory_space<smem>>
    %c57 = arith.constant 57 : index
    %57 = memref.load %arg2[%c57] : memref<82xf32, #tpu.memory_space<smem>>
    %c58 = arith.constant 58 : index
    %58 = memref.load %arg2[%c58] : memref<82xf32, #tpu.memory_space<smem>>
    %c59 = arith.constant 59 : index
    %59 = memref.load %arg2[%c59] : memref<82xf32, #tpu.memory_space<smem>>
    %c60 = arith.constant 60 : index
    %60 = memref.load %arg2[%c60] : memref<82xf32, #tpu.memory_space<smem>>
    %c61 = arith.constant 61 : index
    %61 = memref.load %arg2[%c61] : memref<82xf32, #tpu.memory_space<smem>>
    %c62 = arith.constant 62 : index
    %62 = memref.load %arg2[%c62] : memref<82xf32, #tpu.memory_space<smem>>
    %c63 = arith.constant 63 : index
    %63 = memref.load %arg2[%c63] : memref<82xf32, #tpu.memory_space<smem>>
    %c64 = arith.constant 64 : index
    %64 = memref.load %arg2[%c64] : memref<82xf32, #tpu.memory_space<smem>>
    %c65 = arith.constant 65 : index
    %65 = memref.load %arg2[%c65] : memref<82xf32, #tpu.memory_space<smem>>
    %c66 = arith.constant 66 : index
    %66 = memref.load %arg2[%c66] : memref<82xf32, #tpu.memory_space<smem>>
    %c67 = arith.constant 67 : index
    %67 = memref.load %arg2[%c67] : memref<82xf32, #tpu.memory_space<smem>>
    %c68 = arith.constant 68 : index
    %68 = memref.load %arg2[%c68] : memref<82xf32, #tpu.memory_space<smem>>
    %c69 = arith.constant 69 : index
    %69 = memref.load %arg2[%c69] : memref<82xf32, #tpu.memory_space<smem>>
    %c70 = arith.constant 70 : index
    %70 = memref.load %arg2[%c70] : memref<82xf32, #tpu.memory_space<smem>>
    %c71 = arith.constant 71 : index
    %71 = memref.load %arg2[%c71] : memref<82xf32, #tpu.memory_space<smem>>
    %c72 = arith.constant 72 : index
    %72 = memref.load %arg2[%c72] : memref<82xf32, #tpu.memory_space<smem>>
    %c73 = arith.constant 73 : index
    %73 = memref.load %arg2[%c73] : memref<82xf32, #tpu.memory_space<smem>>
    %c74 = arith.constant 74 : index
    %74 = memref.load %arg2[%c74] : memref<82xf32, #tpu.memory_space<smem>>
    %c75 = arith.constant 75 : index
    %75 = memref.load %arg2[%c75] : memref<82xf32, #tpu.memory_space<smem>>
    %c76 = arith.constant 76 : index
    %76 = memref.load %arg2[%c76] : memref<82xf32, #tpu.memory_space<smem>>
    %c77 = arith.constant 77 : index
    %77 = memref.load %arg2[%c77] : memref<82xf32, #tpu.memory_space<smem>>
    %c78 = arith.constant 78 : index
    %78 = memref.load %arg2[%c78] : memref<82xf32, #tpu.memory_space<smem>>
    %c79 = arith.constant 79 : index
    %79 = memref.load %arg2[%c79] : memref<82xf32, #tpu.memory_space<smem>>
    %c80 = arith.constant 80 : index
    %80 = memref.load %arg2[%c80] : memref<82xf32, #tpu.memory_space<smem>>
    %c81 = arith.constant 81 : index
    %81 = memref.load %arg2[%c81] : memref<82xf32, #tpu.memory_space<smem>>
    %c0_0 = arith.constant 0 : index
    %82 = memref.load %arg3[%c0_0] : memref<13xf32, #tpu.memory_space<smem>>
    %c1_1 = arith.constant 1 : index
    %83 = memref.load %arg3[%c1_1] : memref<13xf32, #tpu.memory_space<smem>>
    %c2_2 = arith.constant 2 : index
    %84 = memref.load %arg3[%c2_2] : memref<13xf32, #tpu.memory_space<smem>>
    %c3_3 = arith.constant 3 : index
    %85 = memref.load %arg3[%c3_3] : memref<13xf32, #tpu.memory_space<smem>>
    %c4_4 = arith.constant 4 : index
    %86 = memref.load %arg3[%c4_4] : memref<13xf32, #tpu.memory_space<smem>>
    %c5_5 = arith.constant 5 : index
    %87 = memref.load %arg3[%c5_5] : memref<13xf32, #tpu.memory_space<smem>>
    %c6_6 = arith.constant 6 : index
    %88 = memref.load %arg3[%c6_6] : memref<13xf32, #tpu.memory_space<smem>>
    %c7_7 = arith.constant 7 : index
    %89 = memref.load %arg3[%c7_7] : memref<13xf32, #tpu.memory_space<smem>>
    %c8_8 = arith.constant 8 : index
    %90 = memref.load %arg3[%c8_8] : memref<13xf32, #tpu.memory_space<smem>>
    %c9_9 = arith.constant 9 : index
    %91 = memref.load %arg3[%c9_9] : memref<13xf32, #tpu.memory_space<smem>>
    %c10_10 = arith.constant 10 : index
    %92 = memref.load %arg3[%c10_10] : memref<13xf32, #tpu.memory_space<smem>>
    %c11_11 = arith.constant 11 : index
    %93 = memref.load %arg3[%c11_11] : memref<13xf32, #tpu.memory_space<smem>>
    %c12_12 = arith.constant 12 : index
    %94 = memref.load %arg3[%c12_12] : memref<13xf32, #tpu.memory_space<smem>>
    %c0_i32 = arith.constant 0 : i32
    %c1_i32 = arith.constant 1 : i32
    %95 = arith.muli %c0_i32, %c1_i32 : i32
    %c0_i32_13 = arith.constant 0 : i32
    %96 = arith.addi %c0_i32_13, %95 : i32
    %c8_i32 = arith.constant 8 : i32
    %97 = arith.muli %96, %c8_i32 : i32
    %98 = tpu.assume_multiple %97, 8 : i32
    %c0_14 = arith.constant 0 : index
    %99 = arith.index_cast %98 : i32 to index
    %c0_15 = arith.constant 0 : index
    %100 = vector.load %arg1[%c0_14, %99, %c0_15] : memref<8x8x128xf32, #tpu.memory_space<vmem>>, vector<1x8x128xf32>
    %101 = vector.shape_cast %100 : vector<1x8x128xf32> to vector<8x128xf32>
    %c1_16 = arith.constant 1 : index
    %102 = arith.index_cast %98 : i32 to index
    %c0_17 = arith.constant 0 : index
    %103 = vector.load %arg1[%c1_16, %102, %c0_17] : memref<8x8x128xf32, #tpu.memory_space<vmem>>, vector<1x8x128xf32>
    %104 = vector.shape_cast %103 : vector<1x8x128xf32> to vector<8x128xf32>
    %c2_18 = arith.constant 2 : index
    %105 = arith.index_cast %98 : i32 to index
    %c0_19 = arith.constant 0 : index
    %106 = vector.load %arg1[%c2_18, %105, %c0_19] : memref<8x8x128xf32, #tpu.memory_space<vmem>>, vector<1x8x128xf32>
    %107 = vector.shape_cast %106 : vector<1x8x128xf32> to vector<8x128xf32>
    %c3_20 = arith.constant 3 : index
    %108 = arith.index_cast %98 : i32 to index
    %c0_21 = arith.constant 0 : index
    %109 = vector.load %arg1[%c3_20, %108, %c0_21] : memref<8x8x128xf32, #tpu.memory_space<vmem>>, vector<1x8x128xf32>
    %110 = vector.shape_cast %109 : vector<1x8x128xf32> to vector<8x128xf32>
    %c4_22 = arith.constant 4 : index
    %111 = arith.index_cast %98 : i32 to index
    %c0_23 = arith.constant 0 : index
    %112 = vector.load %arg1[%c4_22, %111, %c0_23] : memref<8x8x128xf32, #tpu.memory_space<vmem>>, vector<1x8x128xf32>
    %113 = vector.shape_cast %112 : vector<1x8x128xf32> to vector<8x128xf32>
    %c5_24 = arith.constant 5 : index
    %114 = arith.index_cast %98 : i32 to index
    %c0_25 = arith.constant 0 : index
    %115 = vector.load %arg1[%c5_24, %114, %c0_25] : memref<8x8x128xf32, #tpu.memory_space<vmem>>, vector<1x8x128xf32>
    %116 = vector.shape_cast %115 : vector<1x8x128xf32> to vector<8x128xf32>
    %c6_26 = arith.constant 6 : index
    %117 = arith.index_cast %98 : i32 to index
    %c0_27 = arith.constant 0 : index
    %118 = vector.load %arg1[%c6_26, %117, %c0_27] : memref<8x8x128xf32, #tpu.memory_space<vmem>>, vector<1x8x128xf32>
    %119 = vector.shape_cast %118 : vector<1x8x128xf32> to vector<8x128xf32>
    %c7_28 = arith.constant 7 : index
    %120 = arith.index_cast %98 : i32 to index
    %c0_29 = arith.constant 0 : index
    %121 = vector.load %arg1[%c7_28, %120, %c0_29] : memref<8x8x128xf32, #tpu.memory_space<vmem>>, vector<1x8x128xf32>
    %122 = vector.shape_cast %121 : vector<1x8x128xf32> to vector<8x128xf32>
    %123 = vector.broadcast %0 : f32 to vector<8x128xf32>
    %124 = arith.mulf %101, %123 : vector<8x128xf32>
    %125 = vector.broadcast %82 : f32 to vector<8x128xf32>
    %126 = arith.addf %124, %125 : vector<8x128xf32>
    %127 = vector.broadcast %6 : f32 to vector<8x128xf32>
    %128 = arith.mulf %104, %127 : vector<8x128xf32>
    %129 = arith.addf %126, %128 : vector<8x128xf32>
    %130 = vector.broadcast %12 : f32 to vector<8x128xf32>
    %131 = arith.mulf %107, %130 : vector<8x128xf32>
    %132 = arith.addf %129, %131 : vector<8x128xf32>
    %133 = vector.broadcast %18 : f32 to vector<8x128xf32>
    %134 = arith.mulf %110, %133 : vector<8x128xf32>
    %135 = arith.addf %132, %134 : vector<8x128xf32>
    %136 = vector.broadcast %24 : f32 to vector<8x128xf32>
    %137 = arith.mulf %113, %136 : vector<8x128xf32>
    %138 = arith.addf %135, %137 : vector<8x128xf32>
    %139 = vector.broadcast %30 : f32 to vector<8x128xf32>
    %140 = arith.mulf %116, %139 : vector<8x128xf32>
    %141 = arith.addf %138, %140 : vector<8x128xf32>
    %142 = vector.broadcast %36 : f32 to vector<8x128xf32>
    %143 = arith.mulf %119, %142 : vector<8x128xf32>
    %144 = arith.addf %141, %143 : vector<8x128xf32>
    %145 = vector.broadcast %42 : f32 to vector<8x128xf32>
    %146 = arith.mulf %122, %145 : vector<8x128xf32>
    %147 = arith.addf %144, %146 : vector<8x128xf32>
    %cst = arith.constant 5.000000e-01 : f32
    %148 = vector.broadcast %cst : f32 to vector<8x128xf32>
    %149 = arith.mulf %148, %147 : vector<8x128xf32>
    %150 = math.tanh %149 : vector<8x128xf32>
    %cst_30 = arith.constant 5.000000e-01 : f32
    %151 = vector.broadcast %cst_30 : f32 to vector<8x128xf32>
    %152 = arith.mulf %151, %150 : vector<8x128xf32>
    %cst_31 = arith.constant 5.000000e-01 : f32
    %153 = vector.broadcast %cst_31 : f32 to vector<8x128xf32>
    %154 = arith.addf %152, %153 : vector<8x128xf32>
    %155 = vector.broadcast %1 : f32 to vector<8x128xf32>
    %156 = arith.mulf %101, %155 : vector<8x128xf32>
    %157 = vector.broadcast %83 : f32 to vector<8x128xf32>
    %158 = arith.addf %156, %157 : vector<8x128xf32>
    %159 = vector.broadcast %7 : f32 to vector<8x128xf32>
    %160 = arith.mulf %104, %159 : vector<8x128xf32>
    %161 = arith.addf %158, %160 : vector<8x128xf32>
    %162 = vector.broadcast %13 : f32 to vector<8x128xf32>
    %163 = arith.mulf %107, %162 : vector<8x128xf32>
    %164 = arith.addf %161, %163 : vector<8x128xf32>
    %165 = vector.broadcast %19 : f32 to vector<8x128xf32>
    %166 = arith.mulf %110, %165 : vector<8x128xf32>
    %167 = arith.addf %164, %166 : vector<8x128xf32>
    %168 = vector.broadcast %25 : f32 to vector<8x128xf32>
    %169 = arith.mulf %113, %168 : vector<8x128xf32>
    %170 = arith.addf %167, %169 : vector<8x128xf32>
    %171 = vector.broadcast %31 : f32 to vector<8x128xf32>
    %172 = arith.mulf %116, %171 : vector<8x128xf32>
    %173 = arith.addf %170, %172 : vector<8x128xf32>
    %174 = vector.broadcast %37 : f32 to vector<8x128xf32>
    %175 = arith.mulf %119, %174 : vector<8x128xf32>
    %176 = arith.addf %173, %175 : vector<8x128xf32>
    %177 = vector.broadcast %43 : f32 to vector<8x128xf32>
    %178 = arith.mulf %122, %177 : vector<8x128xf32>
    %179 = arith.addf %176, %178 : vector<8x128xf32>
    %cst_32 = arith.constant 5.000000e-01 : f32
    %180 = vector.broadcast %cst_32 : f32 to vector<8x128xf32>
    %181 = arith.mulf %180, %179 : vector<8x128xf32>
    %182 = math.tanh %181 : vector<8x128xf32>
    %cst_33 = arith.constant 5.000000e-01 : f32
    %183 = vector.broadcast %cst_33 : f32 to vector<8x128xf32>
    %184 = arith.mulf %183, %182 : vector<8x128xf32>
    %cst_34 = arith.constant 5.000000e-01 : f32
    %185 = vector.broadcast %cst_34 : f32 to vector<8x128xf32>
    %186 = arith.addf %184, %185 : vector<8x128xf32>
    %187 = vector.broadcast %2 : f32 to vector<8x128xf32>
    %188 = arith.mulf %101, %187 : vector<8x128xf32>
    %189 = vector.broadcast %84 : f32 to vector<8x128xf32>
    %190 = arith.addf %188, %189 : vector<8x128xf32>
    %191 = vector.broadcast %8 : f32 to vector<8x128xf32>
    %192 = arith.mulf %104, %191 : vector<8x128xf32>
    %193 = arith.addf %190, %192 : vector<8x128xf32>
    %194 = vector.broadcast %14 : f32 to vector<8x128xf32>
    %195 = arith.mulf %107, %194 : vector<8x128xf32>
    %196 = arith.addf %193, %195 : vector<8x128xf32>
    %197 = vector.broadcast %20 : f32 to vector<8x128xf32>
    %198 = arith.mulf %110, %197 : vector<8x128xf32>
    %199 = arith.addf %196, %198 : vector<8x128xf32>
    %200 = vector.broadcast %26 : f32 to vector<8x128xf32>
    %201 = arith.mulf %113, %200 : vector<8x128xf32>
    %202 = arith.addf %199, %201 : vector<8x128xf32>
    %203 = vector.broadcast %32 : f32 to vector<8x128xf32>
    %204 = arith.mulf %116, %203 : vector<8x128xf32>
    %205 = arith.addf %202, %204 : vector<8x128xf32>
    %206 = vector.broadcast %38 : f32 to vector<8x128xf32>
    %207 = arith.mulf %119, %206 : vector<8x128xf32>
    %208 = arith.addf %205, %207 : vector<8x128xf32>
    %209 = vector.broadcast %44 : f32 to vector<8x128xf32>
    %210 = arith.mulf %122, %209 : vector<8x128xf32>
    %211 = arith.addf %208, %210 : vector<8x128xf32>
    %cst_35 = arith.constant 5.000000e-01 : f32
    %212 = vector.broadcast %cst_35 : f32 to vector<8x128xf32>
    %213 = arith.mulf %212, %211 : vector<8x128xf32>
    %214 = math.tanh %213 : vector<8x128xf32>
    %cst_36 = arith.constant 5.000000e-01 : f32
    %215 = vector.broadcast %cst_36 : f32 to vector<8x128xf32>
    %216 = arith.mulf %215, %214 : vector<8x128xf32>
    %cst_37 = arith.constant 5.000000e-01 : f32
    %217 = vector.broadcast %cst_37 : f32 to vector<8x128xf32>
    %218 = arith.addf %216, %217 : vector<8x128xf32>
    %219 = vector.broadcast %3 : f32 to vector<8x128xf32>
    %220 = arith.mulf %101, %219 : vector<8x128xf32>
    %221 = vector.broadcast %85 : f32 to vector<8x128xf32>
    %222 = arith.addf %220, %221 : vector<8x128xf32>
    %223 = vector.broadcast %9 : f32 to vector<8x128xf32>
    %224 = arith.mulf %104, %223 : vector<8x128xf32>
    %225 = arith.addf %222, %224 : vector<8x128xf32>
    %226 = vector.broadcast %15 : f32 to vector<8x128xf32>
    %227 = arith.mulf %107, %226 : vector<8x128xf32>
    %228 = arith.addf %225, %227 : vector<8x128xf32>
    %229 = vector.broadcast %21 : f32 to vector<8x128xf32>
    %230 = arith.mulf %110, %229 : vector<8x128xf32>
    %231 = arith.addf %228, %230 : vector<8x128xf32>
    %232 = vector.broadcast %27 : f32 to vector<8x128xf32>
    %233 = arith.mulf %113, %232 : vector<8x128xf32>
    %234 = arith.addf %231, %233 : vector<8x128xf32>
    %235 = vector.broadcast %33 : f32 to vector<8x128xf32>
    %236 = arith.mulf %116, %235 : vector<8x128xf32>
    %237 = arith.addf %234, %236 : vector<8x128xf32>
    %238 = vector.broadcast %39 : f32 to vector<8x128xf32>
    %239 = arith.mulf %119, %238 : vector<8x128xf32>
    %240 = arith.addf %237, %239 : vector<8x128xf32>
    %241 = vector.broadcast %45 : f32 to vector<8x128xf32>
    %242 = arith.mulf %122, %241 : vector<8x128xf32>
    %243 = arith.addf %240, %242 : vector<8x128xf32>
    %cst_38 = arith.constant 5.000000e-01 : f32
    %244 = vector.broadcast %cst_38 : f32 to vector<8x128xf32>
    %245 = arith.mulf %244, %243 : vector<8x128xf32>
    %246 = math.tanh %245 : vector<8x128xf32>
    %cst_39 = arith.constant 5.000000e-01 : f32
    %247 = vector.broadcast %cst_39 : f32 to vector<8x128xf32>
    %248 = arith.mulf %247, %246 : vector<8x128xf32>
    %cst_40 = arith.constant 5.000000e-01 : f32
    %249 = vector.broadcast %cst_40 : f32 to vector<8x128xf32>
    %250 = arith.addf %248, %249 : vector<8x128xf32>
    %251 = vector.broadcast %4 : f32 to vector<8x128xf32>
    %252 = arith.mulf %101, %251 : vector<8x128xf32>
    %253 = vector.broadcast %86 : f32 to vector<8x128xf32>
    %254 = arith.addf %252, %253 : vector<8x128xf32>
    %255 = vector.broadcast %10 : f32 to vector<8x128xf32>
    %256 = arith.mulf %104, %255 : vector<8x128xf32>
    %257 = arith.addf %254, %256 : vector<8x128xf32>
    %258 = vector.broadcast %16 : f32 to vector<8x128xf32>
    %259 = arith.mulf %107, %258 : vector<8x128xf32>
    %260 = arith.addf %257, %259 : vector<8x128xf32>
    %261 = vector.broadcast %22 : f32 to vector<8x128xf32>
    %262 = arith.mulf %110, %261 : vector<8x128xf32>
    %263 = arith.addf %260, %262 : vector<8x128xf32>
    %264 = vector.broadcast %28 : f32 to vector<8x128xf32>
    %265 = arith.mulf %113, %264 : vector<8x128xf32>
    %266 = arith.addf %263, %265 : vector<8x128xf32>
    %267 = vector.broadcast %34 : f32 to vector<8x128xf32>
    %268 = arith.mulf %116, %267 : vector<8x128xf32>
    %269 = arith.addf %266, %268 : vector<8x128xf32>
    %270 = vector.broadcast %40 : f32 to vector<8x128xf32>
    %271 = arith.mulf %119, %270 : vector<8x128xf32>
    %272 = arith.addf %269, %271 : vector<8x128xf32>
    %273 = vector.broadcast %46 : f32 to vector<8x128xf32>
    %274 = arith.mulf %122, %273 : vector<8x128xf32>
    %275 = arith.addf %272, %274 : vector<8x128xf32>
    %cst_41 = arith.constant 5.000000e-01 : f32
    %276 = vector.broadcast %cst_41 : f32 to vector<8x128xf32>
    %277 = arith.mulf %276, %275 : vector<8x128xf32>
    %278 = math.tanh %277 : vector<8x128xf32>
    %cst_42 = arith.constant 5.000000e-01 : f32
    %279 = vector.broadcast %cst_42 : f32 to vector<8x128xf32>
    %280 = arith.mulf %279, %278 : vector<8x128xf32>
    %cst_43 = arith.constant 5.000000e-01 : f32
    %281 = vector.broadcast %cst_43 : f32 to vector<8x128xf32>
    %282 = arith.addf %280, %281 : vector<8x128xf32>
    %283 = vector.broadcast %5 : f32 to vector<8x128xf32>
    %284 = arith.mulf %101, %283 : vector<8x128xf32>
    %285 = vector.broadcast %87 : f32 to vector<8x128xf32>
    %286 = arith.addf %284, %285 : vector<8x128xf32>
    %287 = vector.broadcast %11 : f32 to vector<8x128xf32>
    %288 = arith.mulf %104, %287 : vector<8x128xf32>
    %289 = arith.addf %286, %288 : vector<8x128xf32>
    %290 = vector.broadcast %17 : f32 to vector<8x128xf32>
    %291 = arith.mulf %107, %290 : vector<8x128xf32>
    %292 = arith.addf %289, %291 : vector<8x128xf32>
    %293 = vector.broadcast %23 : f32 to vector<8x128xf32>
    %294 = arith.mulf %110, %293 : vector<8x128xf32>
    %295 = arith.addf %292, %294 : vector<8x128xf32>
    %296 = vector.broadcast %29 : f32 to vector<8x128xf32>
    %297 = arith.mulf %113, %296 : vector<8x128xf32>
    %298 = arith.addf %295, %297 : vector<8x128xf32>
    %299 = vector.broadcast %35 : f32 to vector<8x128xf32>
    %300 = arith.mulf %116, %299 : vector<8x128xf32>
    %301 = arith.addf %298, %300 : vector<8x128xf32>
    %302 = vector.broadcast %41 : f32 to vector<8x128xf32>
    %303 = arith.mulf %119, %302 : vector<8x128xf32>
    %304 = arith.addf %301, %303 : vector<8x128xf32>
    %305 = vector.broadcast %47 : f32 to vector<8x128xf32>
    %306 = arith.mulf %122, %305 : vector<8x128xf32>
    %307 = arith.addf %304, %306 : vector<8x128xf32>
    %cst_44 = arith.constant 5.000000e-01 : f32
    %308 = vector.broadcast %cst_44 : f32 to vector<8x128xf32>
    %309 = arith.mulf %308, %307 : vector<8x128xf32>
    %310 = math.tanh %309 : vector<8x128xf32>
    %cst_45 = arith.constant 5.000000e-01 : f32
    %311 = vector.broadcast %cst_45 : f32 to vector<8x128xf32>
    %312 = arith.mulf %311, %310 : vector<8x128xf32>
    %cst_46 = arith.constant 5.000000e-01 : f32
    %313 = vector.broadcast %cst_46 : f32 to vector<8x128xf32>
    %314 = arith.addf %312, %313 : vector<8x128xf32>
    %315 = vector.broadcast %48 : f32 to vector<8x128xf32>
    %316 = arith.mulf %154, %315 : vector<8x128xf32>
    %317 = vector.broadcast %88 : f32 to vector<8x128xf32>
    %318 = arith.addf %316, %317 : vector<8x128xf32>
    %319 = vector.broadcast %52 : f32 to vector<8x128xf32>
    %320 = arith.mulf %186, %319 : vector<8x128xf32>
    %321 = arith.addf %318, %320 : vector<8x128xf32>
    %322 = vector.broadcast %56 : f32 to vector<8x128xf32>
    %323 = arith.mulf %218, %322 : vector<8x128xf32>
    %324 = arith.addf %321, %323 : vector<8x128xf32>
    %325 = vector.broadcast %60 : f32 to vector<8x128xf32>
    %326 = arith.mulf %250, %325 : vector<8x128xf32>
    %327 = arith.addf %324, %326 : vector<8x128xf32>
    %328 = vector.broadcast %64 : f32 to vector<8x128xf32>
    %329 = arith.mulf %282, %328 : vector<8x128xf32>
    %330 = arith.addf %327, %329 : vector<8x128xf32>
    %331 = vector.broadcast %68 : f32 to vector<8x128xf32>
    %332 = arith.mulf %314, %331 : vector<8x128xf32>
    %333 = arith.addf %330, %332 : vector<8x128xf32>
    %cst_47 = arith.constant 5.000000e-01 : f32
    %334 = vector.broadcast %cst_47 : f32 to vector<8x128xf32>
    %335 = arith.mulf %334, %333 : vector<8x128xf32>
    %336 = math.tanh %335 : vector<8x128xf32>
    %cst_48 = arith.constant 5.000000e-01 : f32
    %337 = vector.broadcast %cst_48 : f32 to vector<8x128xf32>
    %338 = arith.mulf %337, %336 : vector<8x128xf32>
    %cst_49 = arith.constant 5.000000e-01 : f32
    %339 = vector.broadcast %cst_49 : f32 to vector<8x128xf32>
    %340 = arith.addf %338, %339 : vector<8x128xf32>
    %341 = vector.broadcast %49 : f32 to vector<8x128xf32>
    %342 = arith.mulf %154, %341 : vector<8x128xf32>
    %343 = vector.broadcast %89 : f32 to vector<8x128xf32>
    %344 = arith.addf %342, %343 : vector<8x128xf32>
    %345 = vector.broadcast %53 : f32 to vector<8x128xf32>
    %346 = arith.mulf %186, %345 : vector<8x128xf32>
    %347 = arith.addf %344, %346 : vector<8x128xf32>
    %348 = vector.broadcast %57 : f32 to vector<8x128xf32>
    %349 = arith.mulf %218, %348 : vector<8x128xf32>
    %350 = arith.addf %347, %349 : vector<8x128xf32>
    %351 = vector.broadcast %61 : f32 to vector<8x128xf32>
    %352 = arith.mulf %250, %351 : vector<8x128xf32>
    %353 = arith.addf %350, %352 : vector<8x128xf32>
    %354 = vector.broadcast %65 : f32 to vector<8x128xf32>
    %355 = arith.mulf %282, %354 : vector<8x128xf32>
    %356 = arith.addf %353, %355 : vector<8x128xf32>
    %357 = vector.broadcast %69 : f32 to vector<8x128xf32>
    %358 = arith.mulf %314, %357 : vector<8x128xf32>
    %359 = arith.addf %356, %358 : vector<8x128xf32>
    %cst_50 = arith.constant 5.000000e-01 : f32
    %360 = vector.broadcast %cst_50 : f32 to vector<8x128xf32>
    %361 = arith.mulf %360, %359 : vector<8x128xf32>
    %362 = math.tanh %361 : vector<8x128xf32>
    %cst_51 = arith.constant 5.000000e-01 : f32
    %363 = vector.broadcast %cst_51 : f32 to vector<8x128xf32>
    %364 = arith.mulf %363, %362 : vector<8x128xf32>
    %cst_52 = arith.constant 5.000000e-01 : f32
    %365 = vector.broadcast %cst_52 : f32 to vector<8x128xf32>
    %366 = arith.addf %364, %365 : vector<8x128xf32>
    %367 = vector.broadcast %50 : f32 to vector<8x128xf32>
    %368 = arith.mulf %154, %367 : vector<8x128xf32>
    %369 = vector.broadcast %90 : f32 to vector<8x128xf32>
    %370 = arith.addf %368, %369 : vector<8x128xf32>
    %371 = vector.broadcast %54 : f32 to vector<8x128xf32>
    %372 = arith.mulf %186, %371 : vector<8x128xf32>
    %373 = arith.addf %370, %372 : vector<8x128xf32>
    %374 = vector.broadcast %58 : f32 to vector<8x128xf32>
    %375 = arith.mulf %218, %374 : vector<8x128xf32>
    %376 = arith.addf %373, %375 : vector<8x128xf32>
    %377 = vector.broadcast %62 : f32 to vector<8x128xf32>
    %378 = arith.mulf %250, %377 : vector<8x128xf32>
    %379 = arith.addf %376, %378 : vector<8x128xf32>
    %380 = vector.broadcast %66 : f32 to vector<8x128xf32>
    %381 = arith.mulf %282, %380 : vector<8x128xf32>
    %382 = arith.addf %379, %381 : vector<8x128xf32>
    %383 = vector.broadcast %70 : f32 to vector<8x128xf32>
    %384 = arith.mulf %314, %383 : vector<8x128xf32>
    %385 = arith.addf %382, %384 : vector<8x128xf32>
    %cst_53 = arith.constant 5.000000e-01 : f32
    %386 = vector.broadcast %cst_53 : f32 to vector<8x128xf32>
    %387 = arith.mulf %386, %385 : vector<8x128xf32>
    %388 = math.tanh %387 : vector<8x128xf32>
    %cst_54 = arith.constant 5.000000e-01 : f32
    %389 = vector.broadcast %cst_54 : f32 to vector<8x128xf32>
    %390 = arith.mulf %389, %388 : vector<8x128xf32>
    %cst_55 = arith.constant 5.000000e-01 : f32
    %391 = vector.broadcast %cst_55 : f32 to vector<8x128xf32>
    %392 = arith.addf %390, %391 : vector<8x128xf32>
    %393 = vector.broadcast %51 : f32 to vector<8x128xf32>
    %394 = arith.mulf %154, %393 : vector<8x128xf32>
    %395 = vector.broadcast %91 : f32 to vector<8x128xf32>
    %396 = arith.addf %394, %395 : vector<8x128xf32>
    %397 = vector.broadcast %55 : f32 to vector<8x128xf32>
    %398 = arith.mulf %186, %397 : vector<8x128xf32>
    %399 = arith.addf %396, %398 : vector<8x128xf32>
    %400 = vector.broadcast %59 : f32 to vector<8x128xf32>
    %401 = arith.mulf %218, %400 : vector<8x128xf32>
    %402 = arith.addf %399, %401 : vector<8x128xf32>
    %403 = vector.broadcast %63 : f32 to vector<8x128xf32>
    %404 = arith.mulf %250, %403 : vector<8x128xf32>
    %405 = arith.addf %402, %404 : vector<8x128xf32>
    %406 = vector.broadcast %67 : f32 to vector<8x128xf32>
    %407 = arith.mulf %282, %406 : vector<8x128xf32>
    %408 = arith.addf %405, %407 : vector<8x128xf32>
    %409 = vector.broadcast %71 : f32 to vector<8x128xf32>
    %410 = arith.mulf %314, %409 : vector<8x128xf32>
    %411 = arith.addf %408, %410 : vector<8x128xf32>
    %cst_56 = arith.constant 5.000000e-01 : f32
    %412 = vector.broadcast %cst_56 : f32 to vector<8x128xf32>
    %413 = arith.mulf %412, %411 : vector<8x128xf32>
    %414 = math.tanh %413 : vector<8x128xf32>
    %cst_57 = arith.constant 5.000000e-01 : f32
    %415 = vector.broadcast %cst_57 : f32 to vector<8x128xf32>
    %416 = arith.mulf %415, %414 : vector<8x128xf32>
    %cst_58 = arith.constant 5.000000e-01 : f32
    %417 = vector.broadcast %cst_58 : f32 to vector<8x128xf32>
    %418 = arith.addf %416, %417 : vector<8x128xf32>
    %419 = vector.broadcast %72 : f32 to vector<8x128xf32>
    %420 = arith.mulf %340, %419 : vector<8x128xf32>
    %421 = vector.broadcast %92 : f32 to vector<8x128xf32>
    %422 = arith.addf %420, %421 : vector<8x128xf32>
    %423 = vector.broadcast %74 : f32 to vector<8x128xf32>
    %424 = arith.mulf %366, %423 : vector<8x128xf32>
    %425 = arith.addf %422, %424 : vector<8x128xf32>
    %426 = vector.broadcast %76 : f32 to vector<8x128xf32>
    %427 = arith.mulf %392, %426 : vector<8x128xf32>
    %428 = arith.addf %425, %427 : vector<8x128xf32>
    %429 = vector.broadcast %78 : f32 to vector<8x128xf32>
    %430 = arith.mulf %418, %429 : vector<8x128xf32>
    %431 = arith.addf %428, %430 : vector<8x128xf32>
    %cst_59 = arith.constant 5.000000e-01 : f32
    %432 = vector.broadcast %cst_59 : f32 to vector<8x128xf32>
    %433 = arith.mulf %432, %431 : vector<8x128xf32>
    %434 = math.tanh %433 : vector<8x128xf32>
    %cst_60 = arith.constant 5.000000e-01 : f32
    %435 = vector.broadcast %cst_60 : f32 to vector<8x128xf32>
    %436 = arith.mulf %435, %434 : vector<8x128xf32>
    %cst_61 = arith.constant 5.000000e-01 : f32
    %437 = vector.broadcast %cst_61 : f32 to vector<8x128xf32>
    %438 = arith.addf %436, %437 : vector<8x128xf32>
    %439 = vector.broadcast %73 : f32 to vector<8x128xf32>
    %440 = arith.mulf %340, %439 : vector<8x128xf32>
    %441 = vector.broadcast %93 : f32 to vector<8x128xf32>
    %442 = arith.addf %440, %441 : vector<8x128xf32>
    %443 = vector.broadcast %75 : f32 to vector<8x128xf32>
    %444 = arith.mulf %366, %443 : vector<8x128xf32>
    %445 = arith.addf %442, %444 : vector<8x128xf32>
    %446 = vector.broadcast %77 : f32 to vector<8x128xf32>
    %447 = arith.mulf %392, %446 : vector<8x128xf32>
    %448 = arith.addf %445, %447 : vector<8x128xf32>
    %449 = vector.broadcast %79 : f32 to vector<8x128xf32>
    %450 = arith.mulf %418, %449 : vector<8x128xf32>
    %451 = arith.addf %448, %450 : vector<8x128xf32>
    %cst_62 = arith.constant 5.000000e-01 : f32
    %452 = vector.broadcast %cst_62 : f32 to vector<8x128xf32>
    %453 = arith.mulf %452, %451 : vector<8x128xf32>
    %454 = math.tanh %453 : vector<8x128xf32>
    %cst_63 = arith.constant 5.000000e-01 : f32
    %455 = vector.broadcast %cst_63 : f32 to vector<8x128xf32>
    %456 = arith.mulf %455, %454 : vector<8x128xf32>
    %cst_64 = arith.constant 5.000000e-01 : f32
    %457 = vector.broadcast %cst_64 : f32 to vector<8x128xf32>
    %458 = arith.addf %456, %457 : vector<8x128xf32>
    %459 = vector.broadcast %80 : f32 to vector<8x128xf32>
    %460 = arith.mulf %438, %459 : vector<8x128xf32>
    %461 = vector.broadcast %94 : f32 to vector<8x128xf32>
    %462 = arith.addf %460, %461 : vector<8x128xf32>
    %463 = vector.broadcast %81 : f32 to vector<8x128xf32>
    %464 = arith.mulf %458, %463 : vector<8x128xf32>
    %465 = arith.addf %462, %464 : vector<8x128xf32>
    %cst_65 = arith.constant 5.000000e-01 : f32
    %466 = vector.broadcast %cst_65 : f32 to vector<8x128xf32>
    %467 = arith.mulf %466, %465 : vector<8x128xf32>
    %468 = math.tanh %467 : vector<8x128xf32>
    %cst_66 = arith.constant 5.000000e-01 : f32
    %469 = vector.broadcast %cst_66 : f32 to vector<8x128xf32>
    %470 = arith.mulf %469, %468 : vector<8x128xf32>
    %cst_67 = arith.constant 5.000000e-01 : f32
    %471 = vector.broadcast %cst_67 : f32 to vector<8x128xf32>
    %472 = arith.addf %470, %471 : vector<8x128xf32>
    %473 = arith.index_cast %98 : i32 to index
    %c0_68 = arith.constant 0 : index
    %474 = vector.load %arg4[%473, %c0_68] : memref<8x128xf32, #tpu.memory_space<vmem>>, vector<8x128xf32>
    tpu.vector_store %arg4[%473, %c0_68], %472 {strides = array<i32>} : memref<8x128xf32, #tpu.memory_space<vmem>>, vector<8x128xf32>,
    %c1_i32_69 = arith.constant 1 : i32
    return
  }
  func.func @transform_0(%arg0: i32) -> (i32, i32, i32) {
    %c0_i32 = arith.constant 0 : i32
    %c0_i32_0 = arith.constant 0 : i32
    %c0_i32_1 = arith.constant 0 : i32
    return %c0_i32, %arg0, %c0_i32_0 : i32, i32, i32
  }
  func.func @transform_1(%arg0: i32) -> i32 {
    %c0_i32 = arith.constant 0 : i32
    %c0_i32_0 = arith.constant 0 : i32
    return %c0_i32 : i32
  }
  func.func @transform_2(%arg0: i32) -> i32 {
    %c0_i32 = arith.constant 0 : i32
    %c0_i32_0 = arith.constant 0 : i32
    return %c0_i32 : i32
  }
  func.func @transform_3(%arg0: i32) -> (i32, i32) {
    %c0_i32 = arith.constant 0 : i32
    %c0_i32_0 = arith.constant 0 : i32
    return %arg0, %c0_i32 : i32, i32
  }
}

</mosaic_0001>

<llo_original>
// kernel: mlp_forward.1
$region0: #{mlp_forward.1}
  #allocation0 [shape = 'u32[]', space=smem, size = 0x4, offset = 0x4, fixed_abs, tag = 'smem constant byte address 0x4 - core index']
  #allocation1 [shape = 'u32[144,128]{1,0:T(1,128)}', space=vmem, size = 0x12000, scoped, tag = 'internal scratch']
  %s0 = inlined_call_operand.vmem [shape: f32[8,8,128], index: 0, kind: input, shape index: {}]
  %s1 = inlined_call_operand.vmem [shape: f32[82], index: 1, kind: input, shape index: {}]
  %s2 = inlined_call_operand.vmem [shape: f32[13], index: 2, kind: input, shape index: {}]
  %s3 = inlined_call_operand.vmem [shape: f32[8,128], index: 3, kind: output, shape index: {}]
  %s4 = sld [smem:[#allocation0]]
  $region30: #{mlp_forward.1} parent=0
    _
  %s6 = ssub.s32 1, %s4
  %s7 = scalar_select 0, %s6, %s4
  $region1: #{mlp_forward.1} parent=0
    #allocation2 [shape = 'u8[512]{0}', space=smem, size = 0x200, scoped, tag = 'input window, operand 1, single buffered']
    #allocation3 [shape = 's32[1]{0}', space=sflag, size = 0x4, scoped, tag = 'scoped memory for mlp_forward.1']
    #allocation4 [shape = 'u8[512]{0}', space=smem, size = 0x200, scoped, tag = 'input window, operand 2, single buffered']
    #allocation5 [shape = 's32[1]{0}', space=sflag, size = 0x4, scoped, tag = 'scoped memory for mlp_forward.1']
    %8 = vsyncpa [#allocation3], 0
    %9 = vsyncpa [#allocation5], 0
    // Predicated region
    $region2: #{mlp_forward.1} parent=1 // pred_check
      _
    $region3: #{mlp_forward.1} parent=1 // pred_check_branch
      %11 = sbr.rel (0) target = $region5
    $region4: #{mlp_forward.1} parent=1 // pred_region
      _
    $region5: #{mlp_forward.1} parent=1 // pred_fallthru
      _
    // Predicated region
    $region6: #{mlp_forward.1} parent=1 // pred_check
      _
    $region7: #{mlp_forward.1} parent=1 // pred_check_branch
      %13 = sbr.rel (0) target = $region9
    $region8: #{mlp_forward.1} parent=1 // pred_region
      %s15 = ssub.s32 16, 16
      %16 = vsyncadd [#allocation3], %s15
      %s18 = sshll.u32 %s1, 4
      %s19 = int_to_ptr.vmem [resolvable:$true] %s18
      %21 = dma.vmem_to_smem %s19, 16, [#allocation2], [#allocation3]
    $region9: #{mlp_forward.1} parent=1 // pred_fallthru
      _
    // Predicated region
    $region10: #{mlp_forward.1} parent=1 // pred_check
      _
    $region11: #{mlp_forward.1} parent=1 // pred_check_branch
      %23 = sbr.rel (0) target = $region13
    $region12: #{mlp_forward.1} parent=1 // pred_region
      %s25 = ssub.s32 16, 16
      %26 = vsyncadd [#allocation5], %s25
      %s28 = sshll.u32 %s2, 4
      %s29 = int_to_ptr.vmem [resolvable:$true] %s28
      %31 = dma.vmem_to_smem %s29, 16, [#allocation4], [#allocation5]
    $region13: #{mlp_forward.1} parent=1 // pred_fallthru
      _
    // Predicated region
    $region14: #{mlp_forward.1} parent=1 // pred_check
      _
    $region15: #{mlp_forward.1} parent=1 // pred_check_branch
      %33 = sbr.rel (0) target = $region17
    $region16: #{mlp_forward.1} parent=1 // pred_region
      %34 = dma.done [#allocation3], 16
    $region17: #{mlp_forward.1} parent=1 // pred_fallthru
      _
    // Predicated region
    $region18: #{mlp_forward.1} parent=1 // pred_check
      _
    $region19: #{mlp_forward.1} parent=1 // pred_check_branch
      %36 = sbr.rel (0) target = $region21
    $region20: #{mlp_forward.1} parent=1 // pred_region
      %37 = dma.done [#allocation5], 16
    $region21: #{mlp_forward.1} parent=1 // pred_fallthru
      _
    %38 = sfence
    %s39 = sld [smem:[#allocation2]]
    %s40 = sld [smem:[#allocation2 + $0x1]]
    %s41 = sld [smem:[#allocation2 + $0x2]]
    %s42 = sld [smem:[#allocation2 + $0x3]]
    %s43 = sld [smem:[#allocation2 + $0x4]]
    %s44 = sld [smem:[#allocation2 + $0x5]]
    %s45 = sld [smem:[#allocation2 + $0x6]]
    %s46 = sld [smem:[#allocation2 + $0x7]]
    %s47 = sld [smem:[#allocation2 + $0x8]]
    %s48 = sld [smem:[#allocation2 + $0x9]]
    %s49 = sld [smem:[#allocation2 + $0xa]]
    %s50 = sld [smem:[#allocation2 + $0xb]]
    %s51 = sld [smem:[#allocation2 + $0xc]]
    %s52 = sld [smem:[#allocation2 + $0xd]]
    %s53 = sld [smem:[#allocation2 + $0xe]]
    %s54 = sld [smem:[#allocation2 + $0xf]]
    %s55 = sld [smem:[#allocation2 + $0x10]]
    %s56 = sld [smem:[#allocation2 + $0x11]]
    %s57 = sld [smem:[#allocation2 + $0x12]]
    %s58 = sld [smem:[#allocation2 + $0x13]]
    %s59 = sld [smem:[#allocation2 + $0x14]]
    %s60 = sld [smem:[#allocation2 + $0x15]]
    %s61 = sld [smem:[#allocation2 + $0x16]]
    %s62 = sld [smem:[#allocation2 + $0x17]]
    %s63 = sld [smem:[#allocation2 + $0x18]]
    %s64 = sld [smem:[#allocation2 + $0x19]]
    %s65 = sld [smem:[#allocation2 + $0x1a]]
    %s66 = sld [smem:[#allocation2 + $0x1b]]
    %s67 = sld [smem:[#allocation2 + $0x1c]]
    %s68 = sld [smem:[#allocation2 + $0x1d]]
    %s69 = sld [smem:[#allocation2 + $0x1e]]
    %s70 = sld [smem:[#allocation2 + $0x1f]]
    %s71 = sld [smem:[#allocation2 + $0x20]]
    %s72 = sld [smem:[#allocation2 + $0x21]]
    %s73 = sld [smem:[#allocation2 + $0x22]]
    %s74 = sld [smem:[#allocation2 + $0x23]]
    %s75 = sld [smem:[#allocation2 + $0x24]]
    %s76 = sld [smem:[#allocation2 + $0x25]]
    %s77 = sld [smem:[#allocation2 + $0x26]]
    %s78 = sld [smem:[#allocation2 + $0x27]]
    %s79 = sld [smem:[#allocation2 + $0x28]]
    %s80 = sld [smem:[#allocation2 + $0x29]]
    %s81 = sld [smem:[#allocation2 + $0x2a]]
    %s82 = sld [smem:[#allocation2 + $0x2b]]
    %s83 = sld [smem:[#allocation2 + $0x2c]]
    %s84 = sld [smem:[#allocation2 + $0x2d]]
    %s85 = sld [smem:[#allocation2 + $0x2e]]
    %s86 = sld [smem:[#allocation2 + $0x2f]]
    %s87 = sld [smem:[#allocation2 + $0x30]]
    %s88 = sld [smem:[#allocation2 + $0x31]]
    %s89 = sld [smem:[#allocation2 + $0x32]]
    %s90 = sld [smem:[#allocation2 + $0x33]]
    %s91 = sld [smem:[#allocation2 + $0x34]]
    %s92 = sld [smem:[#allocation2 + $0x35]]
    %s93 = sld [smem:[#allocation2 + $0x36]]
    %s94 = sld [smem:[#allocation2 + $0x37]]
    %s95 = sld [smem:[#allocation2 + $0x38]]
    %s96 = sld [smem:[#allocation2 + $0x39]]
    %s97 = sld [smem:[#allocation2 + $0x3a]]
    %s98 = sld [smem:[#allocation2 + $0x3b]]
    %s99 = sld [smem:[#allocation2 + $0x3c]]
    %s100 = sld [smem:[#allocation2 + $0x3d]]
    %s101 = sld [smem:[#allocation2 + $0x3e]]
    %s102 = sld [smem:[#allocation2 + $0x3f]]
    %s103 = sld [smem:[#allocation2 + $0x40]]
    %s104 = sld [smem:[#allocation2 + $0x41]]
    %s105 = sld [smem:[#allocation2 + $0x42]]
    %s106 = sld [smem:[#allocation2 + $0x43]]
    %s107 = sld [smem:[#allocation2 + $0x44]]
    %s108 = sld [smem:[#allocation2 + $0x45]]
    %s109 = sld [smem:[#allocation2 + $0x46]]
    %s110 = sld [smem:[#allocation2 + $0x47]]
    %s111 = sld [smem:[#allocation2 + $0x48]]
    %s112 = sld [smem:[#allocation2 + $0x49]]
    %s113 = sld [smem:[#allocation2 + $0x4a]]
    %s114 = sld [smem:[#allocation2 + $0x4b]]
    %s115 = sld [smem:[#allocation2 + $0x4c]]
    %s116 = sld [smem:[#allocation2 + $0x4d]]
    %s117 = sld [smem:[#allocation2 + $0x4e]]
    %s118 = sld [smem:[#allocation2 + $0x4f]]
    %s119 = sld [smem:[#allocation2 + $0x50]]
    %s120 = sld [smem:[#allocation2 + $0x51]]
    %s121 = sld [smem:[#allocation4]]
    %s122 = sld [smem:[#allocation4 + $0x1]]
    %s123 = sld [smem:[#allocation4 + $0x2]]
    %s124 = sld [smem:[#allocation4 + $0x3]]
    %s125 = sld [smem:[#allocation4 + $0x4]]
    %s126 = sld [smem:[#allocation4 + $0x5]]
    %s127 = sld [smem:[#allocation4 + $0x6]]
    %s128 = sld [smem:[#allocation4 + $0x7]]
    %s129 = sld [smem:[#allocation4 + $0x8]]
    %s130 = sld [smem:[#allocation4 + $0x9]]
    %s131 = sld [smem:[#allocation4 + $0xa]]
    %s132 = sld [smem:[#allocation4 + $0xb]]
    %s133 = sld [smem:[#allocation4 + $0xc]]
    %v134 = vld [vmem:[%s0] sm:$0xff]
    %s135 = sadd.s32 0, 8
    %s136 = scalar_lea.vmem %s0, %s135
    %v137 = vld [vmem:[%s136] sm:$0xff]
    %s138 = sadd.s32 0, 16
    %s139 = scalar_lea.vmem %s0, %s138
    %v140 = vld [vmem:[%s139] sm:$0xff]
    %s141 = sadd.s32 0, 24
    %s142 = scalar_lea.vmem %s0, %s141
    %v143 = vld [vmem:[%s142] sm:$0xff]
    %s144 = sadd.s32 0, 32
    %s145 = scalar_lea.vmem %s0, %s144
    %v146 = vld [vmem:[%s145] sm:$0xff]
    %s147 = sadd.s32 0, 40
    %s148 = scalar_lea.vmem %s0, %s147
    %v149 = vld [vmem:[%s148] sm:$0xff]
    %s150 = sadd.s32 0, 48
    %s151 = scalar_lea.vmem %s0, %s150
    %v152 = vld [vmem:[%s151] sm:$0xff]
    %s153 = sadd.s32 0, 56
    %s154 = scalar_lea.vmem %s0, %s153
    %v155 = vld [vmem:[%s154] sm:$0xff]
    %v156 = vstv %s39
    %v157 = vmul.f32 %v134, %v156
    %v158 = vstv %s121
    %v159 = vadd.f32 %v157, %v158
    %v160 = vstv %s45
    %v161 = vmul.f32 %v137, %v160
    %v162 = vadd.f32 %v159, %v161
    %v163 = vstv %s51
    %v164 = vmul.f32 %v140, %v163
    %v165 = vadd.f32 %v162, %v164
    %v166 = vstv %s57
    %v167 = vmul.f32 %v143, %v166
    %v168 = vadd.f32 %v165, %v167
    %v169 = vstv %s63
    %v170 = vmul.f32 %v146, %v169
    %v171 = vadd.f32 %v168, %v170
    %v172 = vstv %s69
    %v173 = vmul.f32 %v149, %v172
    %v174 = vadd.f32 %v171, %v173
    %v175 = vstv %s75
    %v176 = vmul.f32 %v152, %v175
    %v177 = vadd.f32 %v174, %v176
    %v178 = vstv %s81
    %v179 = vmul.f32 %v155, %v178
    %v180 = vadd.f32 %v177, %v179
    %v181 = vmul.f32 %v180, 0.5
    %v182 = vtanh.pop %v181
    %v183 = vmul.f32 %v182, 0.5
    %v184 = vadd.f32 %v183, 0.5
    %v185 = vstv %s40
    %v186 = vmul.f32 %v134, %v185
    %v187 = vstv %s122
    %v188 = vadd.f32 %v186, %v187
    %v189 = vstv %s46
    %v190 = vmul.f32 %v137, %v189
    %v191 = vadd.f32 %v188, %v190
    %v192 = vstv %s52
    %v193 = vmul.f32 %v140, %v192
    %v194 = vadd.f32 %v191, %v193
    %v195 = vstv %s58
    %v196 = vmul.f32 %v143, %v195
    %v197 = vadd.f32 %v194, %v196
    %v198 = vstv %s64
    %v199 = vmul.f32 %v146, %v198
    %v200 = vadd.f32 %v197, %v199
    %v201 = vstv %s70
    %v202 = vmul.f32 %v149, %v201
    %v203 = vadd.f32 %v200, %v202
    %v204 = vstv %s76
    %v205 = vmul.f32 %v152, %v204
    %v206 = vadd.f32 %v203, %v205
    %v207 = vstv %s82
    %v208 = vmul.f32 %v155, %v207
    %v209 = vadd.f32 %v206, %v208
    %v210 = vmul.f32 %v209, 0.5
    %v211 = vtanh.pop %v210
    %v212 = vmul.f32 %v211, 0.5
    %v213 = vadd.f32 %v212, 0.5
    %v214 = vstv %s41
    %v215 = vmul.f32 %v134, %v214
    %v216 = vstv %s123
    %v217 = vadd.f32 %v215, %v216
    %v218 = vstv %s47
    %v219 = vmul.f32 %v137, %v218
    %v220 = vadd.f32 %v217, %v219
    %v221 = vstv %s53
    %v222 = vmul.f32 %v140, %v221
    %v223 = vadd.f32 %v220, %v222
    %v224 = vstv %s59
    %v225 = vmul.f32 %v143, %v224
    %v226 = vadd.f32 %v223, %v225
    %v227 = vstv %s65
    %v228 = vmul.f32 %v146, %v227
    %v229 = vadd.f32 %v226, %v228
    %v230 = vstv %s71
    %v231 = vmul.f32 %v149, %v230
    %v232 = vadd.f32 %v229, %v231
    %v233 = vstv %s77
    %v234 = vmul.f32 %v152, %v233
    %v235 = vadd.f32 %v232, %v234
    %v236 = vstv %s83
    %v237 = vmul.f32 %v155, %v236
    %v238 = vadd.f32 %v235, %v237
    %v239 = vmul.f32 %v238, 0.5
    %v240 = vtanh.pop %v239
    %v241 = vmul.f32 %v240, 0.5
    %v242 = vadd.f32 %v241, 0.5
    %v243 = vstv %s42
    %v244 = vmul.f32 %v134, %v243
    %v245 = vstv %s124
    %v246 = vadd.f32 %v244, %v245
    %v247 = vstv %s48
    %v248 = vmul.f32 %v137, %v247
    %v249 = vadd.f32 %v246, %v248
    %v250 = vstv %s54
    %v251 = vmul.f32 %v140, %v250
    %v252 = vadd.f32 %v249, %v251
    %v253 = vstv %s60
    %v254 = vmul.f32 %v143, %v253
    %v255 = vadd.f32 %v252, %v254
    %v256 = vstv %s66
    %v257 = vmul.f32 %v146, %v256
    %v258 = vadd.f32 %v255, %v257
    %v259 = vstv %s72
    %v260 = vmul.f32 %v149, %v259
    %v261 = vadd.f32 %v258, %v260
    %v262 = vstv %s78
    %v263 = vmul.f32 %v152, %v262
    %v264 = vadd.f32 %v261, %v263
    %v265 = vstv %s84
    %v266 = vmul.f32 %v155, %v265
    %v267 = vadd.f32 %v264, %v266
    %v268 = vmul.f32 %v267, 0.5
    %v269 = vtanh.pop %v268
    %v270 = vmul.f32 %v269, 0.5
    %v271 = vadd.f32 %v270, 0.5
    %v272 = vstv %s43
    %v273 = vmul.f32 %v134, %v272
    %v274 = vstv %s125
    %v275 = vadd.f32 %v273, %v274
    %v276 = vstv %s49
    %v277 = vmul.f32 %v137, %v276
    %v278 = vadd.f32 %v275, %v277
    %v279 = vstv %s55
    %v280 = vmul.f32 %v140, %v279
    %v281 = vadd.f32 %v278, %v280
    %v282 = vstv %s61
    %v283 = vmul.f32 %v143, %v282
    %v284 = vadd.f32 %v281, %v283
    %v285 = vstv %s67
    %v286 = vmul.f32 %v146, %v285
    %v287 = vadd.f32 %v284, %v286
    %v288 = vstv %s73
    %v289 = vmul.f32 %v149, %v288
    %v290 = vadd.f32 %v287, %v289
    %v291 = vstv %s79
    %v292 = vmul.f32 %v152, %v291
    %v293 = vadd.f32 %v290, %v292
    %v294 = vstv %s85
    %v295 = vmul.f32 %v155, %v294
    %v296 = vadd.f32 %v293, %v295
    %v297 = vmul.f32 %v296, 0.5
    %v298 = vtanh.pop %v297
    %v299 = vmul.f32 %v298, 0.5
    %v300 = vadd.f32 %v299, 0.5
    %v301 = vstv %s44
    %v302 = vmul.f32 %v134, %v301
    %v303 = vstv %s126
    %v304 = vadd.f32 %v302, %v303
    %v305 = vstv %s50
    %v306 = vmul.f32 %v137, %v305
    %v307 = vadd.f32 %v304, %v306
    %v308 = vstv %s56
    %v309 = vmul.f32 %v140, %v308
    %v310 = vadd.f32 %v307, %v309
    %v311 = vstv %s62
    %v312 = vmul.f32 %v143, %v311
    %v313 = vadd.f32 %v310, %v312
    %v314 = vstv %s68
    %v315 = vmul.f32 %v146, %v314
    %v316 = vadd.f32 %v313, %v315
    %v317 = vstv %s74
    %v318 = vmul.f32 %v149, %v317
    %v319 = vadd.f32 %v316, %v318
    %v320 = vstv %s80
    %v321 = vmul.f32 %v152, %v320
    %v322 = vadd.f32 %v319, %v321
    %v323 = vstv %s86
    %v324 = vmul.f32 %v155, %v323
    %v325 = vadd.f32 %v322, %v324
    %v326 = vmul.f32 %v325, 0.5
    %v327 = vtanh.pop %v326
    %v328 = vmul.f32 %v327, 0.5
    %v329 = vadd.f32 %v328, 0.5
    %v330 = vstv %s87
    %v331 = vmul.f32 %v184, %v330
    %v332 = vstv %s127
    %v333 = vadd.f32 %v331, %v332
    %v334 = vstv %s91
    %v335 = vmul.f32 %v213, %v334
    %v336 = vadd.f32 %v333, %v335
    %v337 = vstv %s95
    %v338 = vmul.f32 %v242, %v337
    %v339 = vadd.f32 %v336, %v338
    %v340 = vstv %s99
    %v341 = vmul.f32 %v271, %v340
    %v342 = vadd.f32 %v339, %v341
    %v343 = vstv %s103
    %v344 = vmul.f32 %v300, %v343
    %v345 = vadd.f32 %v342, %v344
    %v346 = vstv %s107
    %v347 = vmul.f32 %v329, %v346
    %v348 = vadd.f32 %v345, %v347
    %v349 = vmul.f32 %v348, 0.5
    %v350 = vtanh.pop %v349
    %v351 = vmul.f32 %v350, 0.5
    %v352 = vadd.f32 %v351, 0.5
    %v353 = vstv %s88
    %v354 = vmul.f32 %v184, %v353
    %v355 = vstv %s128
    %v356 = vadd.f32 %v354, %v355
    %v357 = vstv %s92
    %v358 = vmul.f32 %v213, %v357
    %v359 = vadd.f32 %v356, %v358
    %v360 = vstv %s96
    %v361 = vmul.f32 %v242, %v360
    %v362 = vadd.f32 %v359, %v361
    %v363 = vstv %s100
    %v364 = vmul.f32 %v271, %v363
    %v365 = vadd.f32 %v362, %v364
    %v366 = vstv %s104
    %v367 = vmul.f32 %v300, %v366
    %v368 = vadd.f32 %v365, %v367
    %v369 = vstv %s108
    %v370 = vmul.f32 %v329, %v369
    %v371 = vadd.f32 %v368, %v370
    %v372 = vmul.f32 %v371, 0.5
    %v373 = vtanh.pop %v372
    %v374 = vmul.f32 %v373, 0.5
    %v375 = vadd.f32 %v374, 0.5
    %v376 = vstv %s89
    %v377 = vmul.f32 %v184, %v376
    %v378 = vstv %s129
    %v379 = vadd.f32 %v377, %v378
    %v380 = vstv %s93
    %v381 = vmul.f32 %v213, %v380
    %v382 = vadd.f32 %v379, %v381
    %v383 = vstv %s97
    %v384 = vmul.f32 %v242, %v383
    %v385 = vadd.f32 %v382, %v384
    %v386 = vstv %s101
    %v387 = vmul.f32 %v271, %v386
    %v388 = vadd.f32 %v385, %v387
    %v389 = vstv %s105
    %v390 = vmul.f32 %v300, %v389
    %v391 = vadd.f32 %v388, %v390
    %v392 = vstv %s109
    %v393 = vmul.f32 %v329, %v392
    %v394 = vadd.f32 %v391, %v393
    %v395 = vmul.f32 %v394, 0.5
    %v396 = vtanh.pop %v395
    %v397 = vmul.f32 %v396, 0.5
    %v398 = vadd.f32 %v397, 0.5
    %v399 = vstv %s90
    %v400 = vmul.f32 %v184, %v399
    %v401 = vstv %s130
    %v402 = vadd.f32 %v400, %v401
    %v403 = vstv %s94
    %v404 = vmul.f32 %v213, %v403
    %v405 = vadd.f32 %v402, %v404
    %v406 = vstv %s98
    %v407 = vmul.f32 %v242, %v406
    %v408 = vadd.f32 %v405, %v407
    %v409 = vstv %s102
    %v410 = vmul.f32 %v271, %v409
    %v411 = vadd.f32 %v408, %v410
    %v412 = vstv %s106
    %v413 = vmul.f32 %v300, %v412
    %v414 = vadd.f32 %v411, %v413
    %v415 = vstv %s110
    %v416 = vmul.f32 %v329, %v415
    %v417 = vadd.f32 %v414, %v416
    %v418 = vmul.f32 %v417, 0.5
    %v419 = vtanh.pop %v418
    %v420 = vmul.f32 %v419, 0.5
    %v421 = vadd.f32 %v420, 0.5
    %v422 = vstv %s111
    %v423 = vmul.f32 %v352, %v422
    %v424 = vstv %s131
    %v425 = vadd.f32 %v423, %v424
    %v426 = vstv %s113
    %v427 = vmul.f32 %v375, %v426
    %v428 = vadd.f32 %v425, %v427
    %v429 = vstv %s115
    %v430 = vmul.f32 %v398, %v429
    %v431 = vadd.f32 %v428, %v430
    %v432 = vstv %s117
    %v433 = vmul.f32 %v421, %v432
    %v434 = vadd.f32 %v431, %v433
    %v435 = vmul.f32 %v434, 0.5
    %v436 = vtanh.pop %v435
    %v437 = vmul.f32 %v436, 0.5
    %v438 = vadd.f32 %v437, 0.5
    %v439 = vstv %s112
    %v440 = vmul.f32 %v352, %v439
    %v441 = vstv %s132
    %v442 = vadd.f32 %v440, %v441
    %v443 = vstv %s114
    %v444 = vmul.f32 %v375, %v443
    %v445 = vadd.f32 %v442, %v444
    %v446 = vstv %s116
    %v447 = vmul.f32 %v398, %v446
    %v448 = vadd.f32 %v445, %v447
    %v449 = vstv %s118
    %v450 = vmul.f32 %v421, %v449
    %v451 = vadd.f32 %v448, %v450
    %v452 = vmul.f32 %v451, 0.5
    %v453 = vtanh.pop %v452
    %v454 = vmul.f32 %v453, 0.5
    %v455 = vadd.f32 %v454, 0.5
    %v456 = vstv %s119
    %v457 = vmul.f32 %v438, %v456
    %v458 = vstv %s133
    %v459 = vadd.f32 %v457, %v458
    %v460 = vstv %s120
    %v461 = vmul.f32 %v455, %v460
    %v462 = vadd.f32 %v459, %v461
    %v463 = vmul.f32 %v462, 0.5
    %v464 = vtanh.pop %v463
    %v465 = vmul.f32 %v464, 0.5
    %v466 = vadd.f32 %v465, 0.5
    %467 = vst [vmem:[%s3] sm:$0xff] %v466
    // Predicated region
    $region22: #{mlp_forward.1} parent=1 // pred_check
      _
    $region23: #{mlp_forward.1} parent=1 // pred_check_branch
      %469 = sbr.rel (0) target = $region25
    $region24: #{mlp_forward.1} parent=1 // pred_region
      _
    $region25: #{mlp_forward.1} parent=1 // pred_fallthru
      _
    // Predicated region
    $region26: #{mlp_forward.1} parent=1 // pred_check
      _
    $region27: #{mlp_forward.1} parent=1 // pred_check_branch
      %471 = sbr.rel (0) target = $region29
    $region28: #{mlp_forward.1} parent=1 // pred_region
      _
    $region29: #{mlp_forward.1} parent=1 // pred_fallthru
      _
    %472 = vsyncpa [#allocation3], 1
    %473 = vsyncpa [#allocation5], 1

</llo_original>
